<compile_context>
chip_gen: v7x
topology: tpu7x:2x2x1
jax: 0.10.0
libtpu: 0.0.40
codegen_flags: <defaults>
</compile_context>

<pallas_src>
import functools

import jax
import jax.numpy as jnp
from jax.experimental import pallas as pl
from jax.experimental.pallas import tpu as pltpu


def _round_up(a, m):
    return (a + m - 1) // m * m


def _device_kind():
    try:
        return jax.devices()[0].device_kind.lower()
    except Exception:
        return ""


def make_mlp_params(key, input_dim, num_hidden_layers, num_hidden_units,
                    init_zeros=True):
    """Mimic nn.Linear default init (uniform(-1/sqrt(fan_in), 1/sqrt(fan_in)));
    last layer zeroed if init_zeros.  Weights stored transposed to (in, out) so the
    kernel does x @ W + b; biases stored as (1, out)."""
    dims = [input_dim] + [num_hidden_units] * (num_hidden_layers - 1) + [input_dim]
    params = []
    n_layers = len(dims) - 1
    for i, (din, dout) in enumerate(zip(dims[:-1], dims[1:])):
        key, kw, kb = jax.random.split(key, 3)
        if init_zeros and i == n_layers - 1:
            w = jnp.zeros((din, dout), jnp.float32)
            b = jnp.zeros((1, dout), jnp.float32)
        else:
            bound = 1.0 / (din ** 0.5)
            w = jax.random.uniform(kw, (din, dout), jnp.float32, -bound, bound)
            b = jax.random.uniform(kb, (1, dout), jnp.float32, -bound, bound)
        params.append((w, b))
    return params


def _choose_pack(input_dim, min_width, is_v5e):
    """Smallest power-of-2 row-packing factor making the HBM-facing width a multiple of
    128 lanes; on 256-wide-MXU chips also bump it so hidden activations are lane-dense
    (extra block-diagonal zero FLOPs are free in the DMA-bound regime)."""
    pack = 1
    while (pack * input_dim) % 128 != 0 and pack * input_dim <= 1024:
        pack *= 2
    if (pack * input_dim) % 128 != 0:
        # TODO(synk): feature widths not reachable by power-of-2 packing fall back to
        # masked (partial-lane) stores.
        return 1
    if not is_v5e:
        while pack * min_width < 128 and pack * input_dim < 512:
            pack *= 2
    return pack


def _pack_params(params, pack, weight_dtype):
    """Block-diagonal weight packing so `pack` independent rows share one lane row."""
    packed = []
    for w, b in params:
        din, dout = w.shape
        if pack == 1:
            wp = w.astype(weight_dtype)
        else:
            wp = jnp.zeros((pack * din, pack * dout), weight_dtype)
            for p in range(pack):
                wp = wp.at[p * din:(p + 1) * din,
                           p * dout:(p + 1) * dout].set(w.astype(weight_dtype))
        bp = jnp.tile(b.astype(jnp.float32), (1, pack))
        packed.append((wp, bp))
    return packed


def _mlp_kernel(n_layers, *refs):
    """refs = (x_ref, w0, b0, w1, b1, ..., w_{L-1}, b_{L-1}, o_ref)."""
    x_ref = refs[0]
    o_ref = refs[-1]
    p_refs = refs[1:-1]

    h = x_ref[...].astype(jnp.float32)
    for i in range(n_layers):            # Python-unrolled: full LLO visibility
        w = p_refs[2 * i][...]
        b = p_refs[2 * i + 1][...]
        lhs = h.astype(w.dtype) if w.dtype != h.dtype else h   # bf16 operands on v5e
        h = jnp.dot(lhs, w, preferred_element_type=jnp.float32) + b
        if i < n_layers - 1:              # ReLU after every layer except the last
            h = jnp.maximum(h, 0.0)
    o_ref[...] = h.astype(o_ref.dtype)


def build_mlp_forward(params, *, tm=8192):
    """Pack the MLP weights once and return forward(x) for x of shape (B, C, H, W)."""
    kind = _device_kind()
    is_v5e = ("v5e" in kind) or ("v5 lite" in kind) or ("v5litepod" in kind)
    two_tc = "v7" in kind                 # v7x: 2 TensorCores share the parallel grid

    input_dim = params[0][0].shape[0]
    widths = [w.shape[1] for w, _ in params]
    pack = _choose_pack(input_dim, min(widths + [input_dim]), is_v5e)
    weight_dtype = jnp.bfloat16 if is_v5e else jnp.float32
    packed_params = _pack_params(params, pack, weight_dtype)   # packed ONCE, reused
    n_layers = len(packed_params)
    param_bytes = sum(int(w.size) * w.dtype.itemsize + int(b.size) * b.dtype.itemsize
                      for w, b in packed_params)
    max_width = max(widths + [input_dim])
    tm = _round_up(max(int(tm), 8), 8)

    def vmem_estimate(tm_eff):
        io_tile = tm_eff * pack * input_dim * 4        # f32 input/output tile
        acts = tm_eff * pack * max_width * 4 * 3       # live activations / temporaries
        return 2 * io_tile * 2 + acts + param_bytes + (2 << 20)

    def forward(x):
        B, C, H, W = x.shape
        if W != input_dim:
            raise ValueError(f"last dim {W} != input_dim {input_dim}")
        N = B * C * H
        pad_rows = (-N) % pack            # <= pack-1 rows; only when N is ragged
        x2 = x.reshape(N, W)
        if pad_rows:
            x2 = jnp.pad(x2, ((0, pad_rows), (0, 0)))
        rows = (N + pad_rows) // pack
        xp = x2.reshape(rows, pack * W)   # contiguous reshape: free in XLA

        # Row tile: big by default (amortize per-step overhead, fill DMA), shrunk only
        # for small inputs or when the estimated footprint exceeds the VMEM budget.
        if rows <= tm:
            if two_tc and rows >= 16:     # split only where 2 TCs can actually share it
                tm_eff = _round_up(pl.cdiv(rows, 2), 8)
            else:
                tm_eff = rows             # single full-extent block (serial grid chips)
        else:
            tm_eff = tm
            budget = 40 << 20             # leaves headroom inside v7x's 64 MiB/TC VMEM
            while vmem_estimate(tm_eff) > budget and tm_eff > 1024:
                tm_eff = max(1024, tm_eff // 2)
        grid = pl.cdiv(rows, tm_eff)      # ragged last block handled by Pallas
        vmem_limit = int(min(48 << 20,
                             max(16 << 20, vmem_estimate(tm_eff) + (8 << 20))))

        flat_params = []
        in_specs = [pl.BlockSpec((tm_eff, pack * W), lambda i: (i, 0))]
        for (w, b) in packed_params:
            flat_params += [w, b]
            in_specs.append(pl.BlockSpec(w.shape, lambda i: (0, 0)))  # resident in VMEM
            in_specs.append(pl.BlockSpec(b.shape, lambda i: (0, 0)))

        out = pl.pallas_call(
            functools.partial(_mlp_kernel, n_layers),
            out_shape=jax.ShapeDtypeStruct((rows, pack * W), x.dtype),
            grid=(grid,),
            in_specs=in_specs,
            out_specs=pl.BlockSpec((tm_eff, pack * W), lambda i: (i, 0)),
            compiler_params=pltpu.CompilerParams(
                dimension_semantics=("parallel",),   # shard row grid across TensorCores
                vmem_limit_bytes=vmem_limit,
            ),
        )(xp, *flat_params)

        out = out.reshape(rows * pack, W)
        if pad_rows:
            out = out[:N]
        return out.reshape(B, C, H, W)

    return forward


def mlp_forward(x, params, *, tm=8192):
    """Convenience one-shot wrapper (packs weights per call; prefer build_mlp_forward)."""
    return build_mlp_forward(params, tm=tm)(x)


def mlp_reference(x, params):
    """Pure-JAX reference for correctness checking."""
    B, C, H, W = x.shape
    h = x.reshape(-1, W).astype(jnp.float32)
    n_layers = len(params)
    for i, (w, b) in enumerate(params):
        h = h @ w + b
        if i < n_layers - 1:
            h = jnp.maximum(h, 0.0)
    return h.reshape(B, C, H, W).astype(x.dtype)


if __name__ == "__main__":
    # Module config: input_shape=(2, 8, 8) -> input_dim = prod // 2 = 64
    input_dim = (2 * 8 * 8) // 2          # 64
    num_hidden_layers = 3
    num_hidden_units = 32

    key = jax.random.PRNGKey(0)
    k_x, k_p1, k_p2, k_x2 = jax.random.split(key, 4)

    # Main test: non-zero last layer so every layer's math is actually checked.
    x = jax.random.normal(k_x, (2, 4, 16, input_dim), jnp.float32)
    params = make_mlp_params(k_p1, input_dim, num_hidden_layers,
                             num_hidden_units, init_zeros=False)
    fwd = build_mlp_forward(params)       # weights packed once, reused below
    out = jax.block_until_ready(fwd(x))
    ref = mlp_reference(x, params)
    assert out.shape == x.shape
    # Tolerance covers the MXU's bf16-operand passes (default TPU matmul precision).
    assert jnp.allclose(out, ref, atol=2e-2, rtol=2e-2), "mismatch vs reference"

    # Module default (init_zeros=True): zero-initialized last layer -> all-zero output.
    params_z = make_mlp_params(k_p2, input_dim, num_hidden_layers,
                               num_hidden_units, init_zeros=True)
    out_z = jax.block_until_ready(build_mlp_forward(params_z)(x))
    assert jnp.allclose(out_z, 0.0), "expected zero output with init_zeros=True"

    # Ragged row count: exercises the <=pack-1-row pad + ragged-last-block path.
    x_odd = jax.random.normal(k_x2, (2, 3, 5, input_dim), jnp.float32)
    out_odd = jax.block_until_ready(fwd(x_odd))
    ref_odd = mlp_reference(x_odd, params)
    assert jnp.allclose(out_odd, ref_odd, atol=2e-2, rtol=2e-2), "mismatch (ragged path)"

    print("KERNEL_OK")
</pallas_src>

<mosaic_0001>
module attributes {stable_mosaic.version = 11 : i64} {
  func.func @_mlp_kernel(%arg0: i32, %arg1: memref<32x256xf32, #tpu.memory_space<vmem>>, %arg2: memref<256x128xf32, #tpu.memory_space<vmem>>, %arg3: memref<1x128xf32, #tpu.memory_space<vmem>>, %arg4: memref<128x128xf32, #tpu.memory_space<vmem>>, %arg5: memref<1x128xf32, #tpu.memory_space<vmem>>, %arg6: memref<128x256xf32, #tpu.memory_space<vmem>>, %arg7: memref<1x256xf32, #tpu.memory_space<vmem>>, %arg8: memref<32x256xf32, #tpu.memory_space<vmem>>) attributes {dimension_semantics = [#tpu.dimension_semantics<parallel>], iteration_bounds = array<i64: 1>, scalar_prefetch = 0 : i64, scratch_operands = 0 : i64, tpu.core_type = #tpu.core_type<tc>, window_params = [{transform_indices = @transform_0, window_bounds = array<i64: 32, 256>}, {pipeline_mode = #tpu.pipeline_mode<synchronous>, transform_indices = @transform_1, window_bounds = array<i64: 256, 128>}, {pipeline_mode = #tpu.pipeline_mode<synchronous>, transform_indices = @transform_2, window_bounds = array<i64: 1, 128>}, {pipeline_mode = #tpu.pipeline_mode<synchronous>, transform_indices = @transform_3, window_bounds = array<i64: 128, 128>}, {pipeline_mode = #tpu.pipeline_mode<synchronous>, transform_indices = @transform_4, window_bounds = array<i64: 1, 128>}, {pipeline_mode = #tpu.pipeline_mode<synchronous>, transform_indices = @transform_5, window_bounds = array<i64: 128, 256>}, {pipeline_mode = #tpu.pipeline_mode<synchronous>, transform_indices = @transform_6, window_bounds = array<i64: 1, 256>}, {transform_indices = @transform_7, window_bounds = array<i64: 32, 256>}]} {
    %c0 = arith.constant 0 : index
    %c0_0 = arith.constant 0 : index
    %0 = vector.load %arg1[%c0, %c0_0] : memref<32x256xf32, #tpu.memory_space<vmem>>, vector<32x256xf32>
    %c0_1 = arith.constant 0 : index
    %c0_2 = arith.constant 0 : index
    %1 = vector.load %arg2[%c0_1, %c0_2] : memref<256x128xf32, #tpu.memory_space<vmem>>, vector<256x128xf32>
    %c0_3 = arith.constant 0 : index
    %c0_4 = arith.constant 0 : index
    %2 = vector.load %arg3[%c0_3, %c0_4] : memref<1x128xf32, #tpu.memory_space<vmem>>, vector<1x128xf32>
    %cst = arith.constant dense<0.000000e+00> : vector<32x128xf32>
    %3 = tpu.matmul %0, %1, %cst {dimension_numbers = #tpu.dot_dimension_numbers<[1], [0], [0], [1], [0, 0, 1, 1], [], []>} : vector<32x256xf32>, vector<256x128xf32>, vector<32x128xf32> -> vector<32x128xf32>
    %4 = vector.broadcast %2 : vector<1x128xf32> to vector<32x128xf32>
    %5 = arith.addf %3, %4 : vector<32x128xf32>
    %cst_5 = arith.constant 0.000000e+00 : f32
    %6 = vector.broadcast %cst_5 : f32 to vector<32x128xf32>
    %7 = arith.maximumf %5, %6 : vector<32x128xf32>
    %c0_6 = arith.constant 0 : index
    %c0_7 = arith.constant 0 : index
    %8 = vector.load %arg4[%c0_6, %c0_7] : memref<128x128xf32, #tpu.memory_space<vmem>>, vector<128x128xf32>
    %c0_8 = arith.constant 0 : index
    %c0_9 = arith.constant 0 : index
    %9 = vector.load %arg5[%c0_8, %c0_9] : memref<1x128xf32, #tpu.memory_space<vmem>>, vector<1x128xf32>
    %cst_10 = arith.constant dense<0.000000e+00> : vector<32x128xf32>
    %10 = tpu.matmul %7, %8, %cst_10 {dimension_numbers = #tpu.dot_dimension_numbers<[1], [0], [0], [1], [0, 0, 1, 1], [], []>} : vector<32x128xf32>, vector<128x128xf32>, vector<32x128xf32> -> vector<32x128xf32>
    %11 = vector.broadcast %9 : vector<1x128xf32> to vector<32x128xf32>
    %12 = arith.addf %10, %11 : vector<32x128xf32>
    %cst_11 = arith.constant 0.000000e+00 : f32
    %13 = vector.broadcast %cst_11 : f32 to vector<32x128xf32>
    %14 = arith.maximumf %12, %13 : vector<32x128xf32>
    %c0_12 = arith.constant 0 : index
    %c0_13 = arith.constant 0 : index
    %15 = vector.load %arg6[%c0_12, %c0_13] : memref<128x256xf32, #tpu.memory_space<vmem>>, vector<128x256xf32>
    %c0_14 = arith.constant 0 : index
    %c0_15 = arith.constant 0 : index
    %16 = vector.load %arg7[%c0_14, %c0_15] : memref<1x256xf32, #tpu.memory_space<vmem>>, vector<1x256xf32>
    %cst_16 = arith.constant dense<0.000000e+00> : vector<32x256xf32>
    %17 = tpu.matmul %14, %15, %cst_16 {dimension_numbers = #tpu.dot_dimension_numbers<[1], [0], [0], [1], [0, 0, 1, 1], [], []>} : vector<32x128xf32>, vector<128x256xf32>, vector<32x256xf32> -> vector<32x256xf32>
    %18 = vector.broadcast %16 : vector<1x256xf32> to vector<32x256xf32>
    %19 = arith.addf %17, %18 : vector<32x256xf32>
    %c0_17 = arith.constant 0 : index
    %c0_18 = arith.constant 0 : index
    %20 = vector.load %arg8[%c0_17, %c0_18] : memref<32x256xf32, #tpu.memory_space<vmem>>, vector<32x256xf32>
    tpu.vector_store %arg8[%c0_17, %c0_18], %19 {strides = array<i32>} : memref<32x256xf32, #tpu.memory_space<vmem>>, vector<32x256xf32>,
    return
  }
  func.func @transform_0(%arg0: i32) -> (i32, i32) {
    %c0_i32 = arith.constant 0 : i32
    %c0_i32_0 = arith.constant 0 : i32
    return %arg0, %c0_i32 : i32, i32
  }
  func.func @transform_1(%arg0: i32) -> (i32, i32) {
    %c0_i32 = arith.constant 0 : i32
    %c0_i32_0 = arith.constant 0 : i32
    %c0_i32_1 = arith.constant 0 : i32
    return %c0_i32, %c0_i32_0 : i32, i32
  }
  func.func @transform_2(%arg0: i32) -> (i32, i32) {
    %c0_i32 = arith.constant 0 : i32
    %c0_i32_0 = arith.constant 0 : i32
    %c0_i32_1 = arith.constant 0 : i32
    return %c0_i32, %c0_i32_0 : i32, i32
  }
  func.func @transform_3(%arg0: i32) -> (i32, i32) {
    %c0_i32 = arith.constant 0 : i32
    %c0_i32_0 = arith.constant 0 : i32
    %c0_i32_1 = arith.constant 0 : i32
    return %c0_i32, %c0_i32_0 : i32, i32
  }
  func.func @transform_4(%arg0: i32) -> (i32, i32) {
    %c0_i32 = arith.constant 0 : i32
    %c0_i32_0 = arith.constant 0 : i32
    %c0_i32_1 = arith.constant 0 : i32
    return %c0_i32, %c0_i32_0 : i32, i32
  }
  func.func @transform_5(%arg0: i32) -> (i32, i32) {
    %c0_i32 = arith.constant 0 : i32
    %c0_i32_0 = arith.constant 0 : i32
    %c0_i32_1 = arith.constant 0 : i32
    return %c0_i32, %c0_i32_0 : i32, i32
  }
  func.func @transform_6(%arg0: i32) -> (i32, i32) {
    %c0_i32 = arith.constant 0 : i32
    %c0_i32_0 = arith.constant 0 : i32
    %c0_i32_1 = arith.constant 0 : i32
    return %c0_i32, %c0_i32_0 : i32, i32
  }
  func.func @transform_7(%arg0: i32) -> (i32, i32) {
    %c0_i32 = arith.constant 0 : i32
    %c0_i32_0 = arith.constant 0 : i32
    return %arg0, %c0_i32 : i32, i32
  }
}

</mosaic_0001>

<llo_original>
// kernel: tpu_custom_call.1
$region0: #{tpu_custom_call.1}
  #allocation0 [shape = 'u32[]', space=smem, size = 0x4, offset = 0x4, fixed_abs, tag = 'smem constant byte address 0x4 - core index']
  #allocation1 [shape = 'u32[144,128]{1,0:T(1,128)}', space=vmem, size = 0x12000, scoped, tag = 'internal scratch']
  %s0 = inlined_call_operand.hbm [shape: f32[32,256], index: 0, kind: input, shape index: {}]
  %s1 = inlined_call_operand.hbm [shape: f32[256,128], index: 1, kind: input, shape index: {}]
  %s2 = inlined_call_operand.vmem [shape: f32[1,128], index: 2, kind: input, shape index: {}]
  %s3 = inlined_call_operand.hbm [shape: f32[128,128], index: 3, kind: input, shape index: {}]
  %s4 = inlined_call_operand.vmem [shape: f32[1,128], index: 4, kind: input, shape index: {}]
  %s5 = inlined_call_operand.hbm [shape: f32[128,256], index: 5, kind: input, shape index: {}]
  %s6 = inlined_call_operand.vmem [shape: f32[1,256], index: 6, kind: input, shape index: {}]
  %s7 = inlined_call_operand.hbm [shape: f32[32,256], index: 7, kind: output, shape index: {}]
  %s8 = sld [smem:[#allocation0]]
  $region54: #{tpu_custom_call.1} parent=0
    _
  %s10 = ssub.s32 1, %s8
  %s11 = scalar_select 0, %s10, %s8
  $region1: #{tpu_custom_call.1} parent=0
    #allocation2 [shape = 'u8[32768]{0}', space=vmem, size = 0x8000, scoped, tag = 'input window, operand 0, single buffered']
    #allocation3 [shape = 's32[1]{0}', space=sflag, size = 0x4, scoped, tag = 'scoped memory for tpu_custom_call.1']
    #allocation4 [shape = 's32[1]{0}', space=sflag, size = 0x4, scoped, tag = 'scoped memory for tpu_custom_call.1']
    #allocation5 [shape = 'u8[131072]{0}', space=vmem, size = 0x20000, scoped, tag = 'input window, operand 1, single buffered']
    #allocation6 [shape = 's32[1]{0}', space=sflag, size = 0x4, scoped, tag = 'scoped memory for tpu_custom_call.1']
    #allocation7 [shape = 'u8[65536]{0}', space=vmem, size = 0x10000, scoped, tag = 'input window, operand 3, single buffered']
    #allocation8 [shape = 'u8[131072]{0}', space=vmem, size = 0x20000, scoped, tag = 'input window, operand 5, single buffered']
    #allocation9 [shape = 's32[1]{0}', space=sflag, size = 0x4, scoped, tag = 'scoped memory for tpu_custom_call.1']
    #allocation10 [shape = 'u8[32768]{0}', space=vmem, size = 0x8000, scoped, tag = 'output window, operand 0, single buffered']
    %12 = vsyncpa [#allocation3], 0
    %13 = vsyncpa [#allocation6], 0
    %14 = vsyncpa [#allocation9], 0
    %15 = vsyncpa [#allocation4], 0
    // Predicated region
    $region2: #{tpu_custom_call.1} parent=1 // pred_check
      _
    $region3: #{tpu_custom_call.1} parent=1 // pred_check_branch
      %17 = sbr.rel (0) target = $region5
    $region4: #{tpu_custom_call.1} parent=1 // pred_region
      %s19 = ssub.s32 1024, 1024
      %20 = vsyncadd [#allocation3], %s19
      %s21 = sshll.u32 [#allocation2], 4
      %s22 = int_to_ptr.vmem [resolvable:$true] %s21
      %27 = dma.hbm_to_vmem [thread:$0]  %s0, 1024, %s22, [#allocation3], 256, 256, 16
    $region5: #{tpu_custom_call.1} parent=1 // pred_fallthru
      _
    // Predicated region
    $region6: #{tpu_custom_call.1} parent=1 // pred_check
      _
    $region7: #{tpu_custom_call.1} parent=1 // pred_check_branch
      %29 = sbr.rel (0) target = $region9
    $region8: #{tpu_custom_call.1} parent=1 // pred_region
      %s31 = ssub.s32 4096, 4096
      %32 = vsyncadd [#allocation6], %s31
      %s33 = sshll.u32 [#allocation5], 4
      %s34 = int_to_ptr.vmem [resolvable:$true] %s33
      %39 = dma.hbm_to_vmem [thread:$0]  %s1, 4096, %s34, [#allocation6], 128, 128, 8
    $region9: #{tpu_custom_call.1} parent=1 // pred_fallthru
      _
    // Predicated region
    $region10: #{tpu_custom_call.1} parent=1 // pred_check
      _
    $region11: #{tpu_custom_call.1} parent=1 // pred_check_branch
      %41 = sbr.rel (0) target = $region13
    $region12: #{tpu_custom_call.1} parent=1 // pred_region
      _
    $region13: #{tpu_custom_call.1} parent=1 // pred_fallthru
      _
    // Predicated region
    $region14: #{tpu_custom_call.1} parent=1 // pred_check
      _
    $region15: #{tpu_custom_call.1} parent=1 // pred_check_branch
      %43 = sbr.rel (0) target = $region17
    $region16: #{tpu_custom_call.1} parent=1 // pred_region
      %s45 = ssub.s32 2048, 2048
      %46 = vsyncadd [#allocation6], %s45
      %s47 = sshll.u32 [#allocation7], 4
      %s48 = int_to_ptr.vmem [resolvable:$true] %s47
      %53 = dma.hbm_to_vmem [thread:$0]  %s3, 2048, %s48, [#allocation6], 128, 128, 8
    $region17: #{tpu_custom_call.1} parent=1 // pred_fallthru
      _
    // Predicated region
    $region18: #{tpu_custom_call.1} parent=1 // pred_check
      _
    $region19: #{tpu_custom_call.1} parent=1 // pred_check_branch
      %55 = sbr.rel (0) target = $region21
    $region20: #{tpu_custom_call.1} parent=1 // pred_region
      _
    $region21: #{tpu_custom_call.1} parent=1 // pred_fallthru
      _
    // Predicated region
    $region22: #{tpu_custom_call.1} parent=1 // pred_check
      _
    $region23: #{tpu_custom_call.1} parent=1 // pred_check_branch
      %57 = sbr.rel (0) target = $region25
    $region24: #{tpu_custom_call.1} parent=1 // pred_region
      %s59 = ssub.s32 4096, 4096
      %60 = vsyncadd [#allocation9], %s59
      %s61 = sshll.u32 [#allocation8], 4
      %s62 = int_to_ptr.vmem [resolvable:$true] %s61
      %67 = dma.hbm_to_vmem [thread:$0]  %s5, 4096, %s62, [#allocation9], 256, 256, 16
    $region25: #{tpu_custom_call.1} parent=1 // pred_fallthru
      _
    // Predicated region
    $region26: #{tpu_custom_call.1} parent=1 // pred_check
      _
    $region27: #{tpu_custom_call.1} parent=1 // pred_check_branch
      %69 = sbr.rel (0) target = $region29
    $region28: #{tpu_custom_call.1} parent=1 // pred_region
      _
    $region29: #{tpu_custom_call.1} parent=1 // pred_fallthru
      _
    // Predicated region
    $region30: #{tpu_custom_call.1} parent=1 // pred_check
      _
    $region31: #{tpu_custom_call.1} parent=1 // pred_check_branch
      %71 = sbr.rel (0) target = $region33
    $region32: #{tpu_custom_call.1} parent=1 // pred_region
      %72 = dma.done [#allocation3], 1024
    $region33: #{tpu_custom_call.1} parent=1 // pred_fallthru
      _
    // Predicated region
    $region34: #{tpu_custom_call.1} parent=1 // pred_check
      _
    $region35: #{tpu_custom_call.1} parent=1 // pred_check_branch
      %74 = sbr.rel (0) target = $region37
    $region36: #{tpu_custom_call.1} parent=1 // pred_region
      %75 = dma.done [#allocation6], 4096
    $region37: #{tpu_custom_call.1} parent=1 // pred_fallthru
      _
    // Predicated region
    $region38: #{tpu_custom_call.1} parent=1 // pred_check
      _
    $region39: #{tpu_custom_call.1} parent=1 // pred_check_branch
      %77 = sbr.rel (0) target = $region41
    $region40: #{tpu_custom_call.1} parent=1 // pred_region
      %78 = dma.done [#allocation6], 2048
    $region41: #{tpu_custom_call.1} parent=1 // pred_fallthru
      _
    // Predicated region
    $region42: #{tpu_custom_call.1} parent=1 // pred_check
      _
    $region43: #{tpu_custom_call.1} parent=1 // pred_check_branch
      %80 = sbr.rel (0) target = $region45
    $region44: #{tpu_custom_call.1} parent=1 // pred_region
      %81 = dma.done [#allocation9], 4096
    $region45: #{tpu_custom_call.1} parent=1 // pred_fallthru
      _
    %v82 = vld [vmem:[#allocation2] sm:$0xff]
    %v83 = vld [vmem:[#allocation2 + $0x8] sm:$0xff]
    %v84 = vld [vmem:[#allocation2 + $0x10] sm:$0xff]
    %v85 = vld [vmem:[#allocation2 + $0x18] sm:$0xff]
    %v86 = vld [vmem:[#allocation2 + $0x20] sm:$0xff]
    %v87 = vld [vmem:[#allocation2 + $0x28] sm:$0xff]
    %v88 = vld [vmem:[#allocation2 + $0x30] sm:$0xff]
    %v89 = vld [vmem:[#allocation2 + $0x38] sm:$0xff]
    %v90 = vld [vmem:[#allocation5] sm:$0xff]
    %v91 = vld [vmem:[#allocation5 + $0x8] sm:$0xff]
    %v92 = vld [vmem:[#allocation5 + $0x10] sm:$0xff]
    %v93 = vld [vmem:[#allocation5 + $0x18] sm:$0xff]
    %v94 = vld [vmem:[#allocation5 + $0x20] sm:$0xff]
    %v95 = vld [vmem:[#allocation5 + $0x28] sm:$0xff]
    %v96 = vld [vmem:[#allocation5 + $0x30] sm:$0xff]
    %v97 = vld [vmem:[#allocation5 + $0x38] sm:$0xff]
    %v98 = vld [vmem:[#allocation5 + $0x40] sm:$0xff]
    %v99 = vld [vmem:[#allocation5 + $0x48] sm:$0xff]
    %v100 = vld [vmem:[#allocation5 + $0x50] sm:$0xff]
    %v101 = vld [vmem:[#allocation5 + $0x58] sm:$0xff]
    %v102 = vld [vmem:[#allocation5 + $0x60] sm:$0xff]
    %v103 = vld [vmem:[#allocation5 + $0x68] sm:$0xff]
    %v104 = vld [vmem:[#allocation5 + $0x70] sm:$0xff]
    %v105 = vld [vmem:[#allocation5 + $0x78] sm:$0xff]
    %v106 = vld [vmem:[#allocation5 + $0x80] sm:$0xff]
    %v107 = vld [vmem:[#allocation5 + $0x88] sm:$0xff]
    %v108 = vld [vmem:[#allocation5 + $0x90] sm:$0xff]
    %v109 = vld [vmem:[#allocation5 + $0x98] sm:$0xff]
    %v110 = vld [vmem:[#allocation5 + $0xa0] sm:$0xff]
    %v111 = vld [vmem:[#allocation5 + $0xa8] sm:$0xff]
    %v112 = vld [vmem:[#allocation5 + $0xb0] sm:$0xff]
    %v113 = vld [vmem:[#allocation5 + $0xb8] sm:$0xff]
    %v114 = vld [vmem:[#allocation5 + $0xc0] sm:$0xff]
    %v115 = vld [vmem:[#allocation5 + $0xc8] sm:$0xff]
    %v116 = vld [vmem:[#allocation5 + $0xd0] sm:$0xff]
    %v117 = vld [vmem:[#allocation5 + $0xd8] sm:$0xff]
    %v118 = vld [vmem:[#allocation5 + $0xe0] sm:$0xff]
    %v119 = vld [vmem:[#allocation5 + $0xe8] sm:$0xff]
    %v120 = vld [vmem:[#allocation5 + $0xf0] sm:$0xff]
    %v121 = vld [vmem:[#allocation5 + $0xf8] sm:$0xff]
    %v122 = vld [vmem:[%s2] sm:$0x1]
    %v124 = vlaneseq
    %v125 = vshrl.u32 %v124, 7
    %v126 = vsub.s32 0, %v125
    %v127 = vrot.slane %v122, %v126
    %129 = vmatprep.subr.mxu0 0.0
    %130 = vmatpush1.msra.mxu0 %v90
    %131 = vmatprep.subr.mxu0 0.0
    %132 = vmatpush1.msra.mxu0 %v91
    %133 = vmatprep.subr.mxu0 0.0
    %134 = vmatpush1.msra.mxu0 %v92
    %135 = vmatprep.subr.mxu0 0.0
    %136 = vmatpush1.msra.mxu0 %v93
    %137 = vmatprep.subr.mxu0 0.0
    %138 = vmatpush1.msra.mxu0 %v94
    %139 = vmatprep.subr.mxu0 0.0
    %140 = vmatpush1.msra.mxu0 %v95
    %141 = vmatprep.subr.mxu0 0.0
    %142 = vmatpush1.msra.mxu0 %v96
    %143 = vmatprep.subr.mxu0 0.0
    %144 = vmatpush1.msra.mxu0 %v97
    %145 = vmatprep.subr.mxu0 0.0
    %146 = vmatpush1.msra.mxu0 %v98
    %147 = vmatprep.subr.mxu0 0.0
    %148 = vmatpush1.msra.mxu0 %v99
    %149 = vmatprep.subr.mxu0 0.0
    %150 = vmatpush1.msra.mxu0 %v100
    %151 = vmatprep.subr.mxu0 0.0
    %152 = vmatpush1.msra.mxu0 %v101
    %153 = vmatprep.subr.mxu0 0.0
    %154 = vmatpush1.msra.mxu0 %v102
    %155 = vmatprep.subr.mxu0 0.0
    %156 = vmatpush1.msra.mxu0 %v103
    %157 = vmatprep.subr.mxu0 0.0
    %158 = vmatpush1.msra.mxu0 %v104
    %159 = vmatprep.subr.mxu0 0.0
    %160 = vmatpush1.msra.mxu0 %v105
    %161 = vmatprep.subr.mxu0 0.0
    %162 = vmatpush1.msra.mxu0 %v106
    %163 = vmatprep.subr.mxu0 0.0
    %164 = vmatpush1.msra.mxu0 %v107
    %165 = vmatprep.subr.mxu0 0.0
    %166 = vmatpush1.msra.mxu0 %v108
    %167 = vmatprep.subr.mxu0 0.0
    %168 = vmatpush1.msra.mxu0 %v109
    %169 = vmatprep.subr.mxu0 0.0
    %170 = vmatpush1.msra.mxu0 %v110
    %171 = vmatprep.subr.mxu0 0.0
    %172 = vmatpush1.msra.mxu0 %v111
    %173 = vmatprep.subr.mxu0 0.0
    %174 = vmatpush1.msra.mxu0 %v112
    %175 = vmatprep.subr.mxu0 0.0
    %176 = vmatpush1.msra.mxu0 %v113
    %177 = vmatprep.subr.mxu0 0.0
    %178 = vmatpush1.msra.mxu0 %v114
    %179 = vmatprep.subr.mxu0 0.0
    %180 = vmatpush1.msra.mxu0 %v115
    %181 = vmatprep.subr.mxu0 0.0
    %182 = vmatpush1.msra.mxu0 %v116
    %183 = vmatprep.subr.mxu0 0.0
    %184 = vmatpush1.msra.mxu0 %v117
    %185 = vmatprep.subr.mxu0 0.0
    %186 = vmatpush1.msra.mxu0 %v118
    %187 = vmatprep.subr.mxu0 0.0
    %188 = vmatpush1.msra.mxu0 %v119
    %189 = vmatprep.subr.mxu0 0.0
    %190 = vmatpush1.msra.mxu0 %v120
    %191 = vmatprep.subr.mxu0 0.0
    %192 = vmatpush1.msra.mxu0 %v121
    %193 = vmatprep.mubr.f32.mxu0 %v83
    %194 = vmatmul.mubr.f32.gmra.mrb[0].mxu0 %v82
    %v195 = vpop.f32.mrb[0].mxu0
    %v196 = vadd.f32 %v127, %v195
    %v197 = vpop.f32.mrb[0].mxu0
    %198 = vmatprep.mubr.f32.mxu0 %v85
    %199 = vmatmul.mubr.f32.gmra.mrb[0].mxu0 %v84
    %v200 = vpop.f32.mrb[0].mxu0
    %v201 = vadd.f32 %v127, %v200
    %v202 = vpop.f32.mrb[0].mxu0
    %203 = vmatprep.mubr.f32.mxu0 %v87
    %204 = vmatmul.mubr.f32.gmra.mrb[0].mxu0 %v86
    %v205 = vpop.f32.mrb[0].mxu0
    %v206 = vadd.f32 %v127, %v205
    %v207 = vpop.f32.mrb[0].mxu0
    %208 = vmatprep.mubr.f32.mxu0 %v89
    %209 = vmatmul.mubr.f32.gmra.mrb[0].mxu0 %v88
    %v210 = vpop.f32.mrb[0].mxu0
    %v211 = vadd.f32 %v127, %v210
    %v212 = vpop.f32.mrb[0].mxu0
    %213 = vdwg.mxu0
    %v214 = vmax.f32 %v196, 0.0
    %v215 = vmax.f32 %v201, 0.0
    %v216 = vmax.f32 %v206, 0.0
    %v217 = vmax.f32 %v211, 0.0
    %v218 = vld [vmem:[#allocation7] sm:$0xff]
    %v219 = vld [vmem:[#allocation7 + $0x8] sm:$0xff]
    %v220 = vld [vmem:[#allocation7 + $0x10] sm:$0xff]
    %v221 = vld [vmem:[#allocation7 + $0x18] sm:$0xff]
    %v222 = vld [vmem:[#allocation7 + $0x20] sm:$0xff]
    %v223 = vld [vmem:[#allocation7 + $0x28] sm:$0xff]
    %v224 = vld [vmem:[#allocation7 + $0x30] sm:$0xff]
    %v225 = vld [vmem:[#allocation7 + $0x38] sm:$0xff]
    %v226 = vld [vmem:[#allocation7 + $0x40] sm:$0xff]
    %v227 = vld [vmem:[#allocation7 + $0x48] sm:$0xff]
    %v228 = vld [vmem:[#allocation7 + $0x50] sm:$0xff]
    %v229 = vld [vmem:[#allocation7 + $0x58] sm:$0xff]
    %v230 = vld [vmem:[#allocation7 + $0x60] sm:$0xff]
    %v231 = vld [vmem:[#allocation7 + $0x68] sm:$0xff]
    %v232 = vld [vmem:[#allocation7 + $0x70] sm:$0xff]
    %v233 = vld [vmem:[#allocation7 + $0x78] sm:$0xff]
    %v234 = vld [vmem:[%s4] sm:$0x1]
    %v236 = vlaneseq
    %v237 = vshrl.u32 %v236, 7
    %v238 = vsub.s32 0, %v237
    %v239 = vrot.slane %v234, %v238
    %241 = vmatprep.subr.mxu0 0.0
    %242 = vmatpush1.msra.mxu0 %v218
    %243 = vmatprep.subr.mxu0 0.0
    %244 = vmatpush1.msra.mxu0 %v219
    %245 = vmatprep.subr.mxu0 0.0
    %246 = vmatpush1.msra.mxu0 %v220
    %247 = vmatprep.subr.mxu0 0.0
    %248 = vmatpush1.msra.mxu0 %v221
    %249 = vmatprep.subr.mxu0 0.0
    %250 = vmatpush1.msra.mxu0 %v222
    %251 = vmatprep.subr.mxu0 0.0
    %252 = vmatpush1.msra.mxu0 %v223
    %253 = vmatprep.subr.mxu0 0.0
    %254 = vmatpush1.msra.mxu0 %v224
    %255 = vmatprep.subr.mxu0 0.0
    %256 = vmatpush1.msra.mxu0 %v225
    %257 = vmatprep.subr.mxu0 0.0
    %258 = vmatpush1.msra.mxu0 %v226
    %259 = vmatprep.subr.mxu0 0.0
    %260 = vmatpush1.msra.mxu0 %v227
    %261 = vmatprep.subr.mxu0 0.0
    %262 = vmatpush1.msra.mxu0 %v228
    %263 = vmatprep.subr.mxu0 0.0
    %264 = vmatpush1.msra.mxu0 %v229
    %265 = vmatprep.subr.mxu0 0.0
    %266 = vmatpush1.msra.mxu0 %v230
    %267 = vmatprep.subr.mxu0 0.0
    %268 = vmatpush1.msra.mxu0 %v231
    %269 = vmatprep.subr.mxu0 0.0
    %270 = vmatpush1.msra.mxu0 %v232
    %271 = vmatprep.subr.mxu0 0.0
    %272 = vmatpush1.msra.mxu0 %v233
    %273 = vmatprep.subr.mxu0 0.0
    %274 = vmatpush1.msra.mxu0 0.0
    %275 = vmatprep.subr.mxu0 0.0
    %276 = vmatpush1.msra.mxu0 0.0
    %277 = vmatprep.subr.mxu0 0.0
    %278 = vmatpush1.msra.mxu0 0.0
    %279 = vmatprep.subr.mxu0 0.0
    %280 = vmatpush1.msra.mxu0 0.0
    %281 = vmatprep.subr.mxu0 0.0
    %282 = vmatpush1.msra.mxu0 0.0
    %283 = vmatprep.subr.mxu0 0.0
    %284 = vmatpush1.msra.mxu0 0.0
    %285 = vmatprep.subr.mxu0 0.0
    %286 = vmatpush1.msra.mxu0 0.0
    %287 = vmatprep.subr.mxu0 0.0
    %288 = vmatpush1.msra.mxu0 0.0
    %289 = vmatprep.subr.mxu0 0.0
    %290 = vmatpush1.msra.mxu0 0.0
    %291 = vmatprep.subr.mxu0 0.0
    %292 = vmatpush1.msra.mxu0 0.0
    %293 = vmatprep.subr.mxu0 0.0
    %294 = vmatpush1.msra.mxu0 0.0
    %295 = vmatprep.subr.mxu0 0.0
    %296 = vmatpush1.msra.mxu0 0.0
    %297 = vmatprep.subr.mxu0 0.0
    %298 = vmatpush1.msra.mxu0 0.0
    %299 = vmatprep.subr.mxu0 0.0
    %300 = vmatpush1.msra.mxu0 0.0
    %301 = vmatprep.subr.mxu0 0.0
    %302 = vmatpush1.msra.mxu0 0.0
    %303 = vmatprep.subr.mxu0 0.0
    %304 = vmatpush1.msra.mxu0 0.0
    %305 = vmatprep.mubr.f32.mxu0 0.0
    %306 = vmatmul.mubr.f32.gmra.mrb[0].mxu0 %v214
    %v307 = vpop.f32.mrb[0].mxu0
    %v308 = vadd.f32 %v239, %v307
    %v309 = vpop.f32.mrb[0].mxu0
    %310 = vmatprep.mubr.f32.mxu0 0.0
    %311 = vmatmul.mubr.f32.gmra.mrb[0].mxu0 %v215
    %v312 = vpop.f32.mrb[0].mxu0
    %v313 = vadd.f32 %v239, %v312
    %v314 = vpop.f32.mrb[0].mxu0
    %315 = vmatprep.mubr.f32.mxu0 0.0
    %316 = vmatmul.mubr.f32.gmra.mrb[0].mxu0 %v216
    %v317 = vpop.f32.mrb[0].mxu0
    %v318 = vadd.f32 %v239, %v317
    %v319 = vpop.f32.mrb[0].mxu0
    %320 = vmatprep.mubr.f32.mxu0 0.0
    %321 = vmatmul.mubr.f32.gmra.mrb[0].mxu0 %v217
    %v322 = vpop.f32.mrb[0].mxu0
    %v323 = vadd.f32 %v239, %v322
    %v324 = vpop.f32.mrb[0].mxu0
    %325 = vdwg.mxu0
    %v326 = vmax.f32 %v308, 0.0
    %v327 = vmax.f32 %v313, 0.0
    %v328 = vmax.f32 %v318, 0.0
    %v329 = vmax.f32 %v323, 0.0
    %v330 = vld [vmem:[#allocation8] sm:$0xff]
    %v331 = vld [vmem:[#allocation8 + $0x8] sm:$0xff]
    %v332 = vld [vmem:[#allocation8 + $0x10] sm:$0xff]
    %v333 = vld [vmem:[#allocation8 + $0x18] sm:$0xff]
    %v334 = vld [vmem:[#allocation8 + $0x20] sm:$0xff]
    %v335 = vld [vmem:[#allocation8 + $0x28] sm:$0xff]
    %v336 = vld [vmem:[#allocation8 + $0x30] sm:$0xff]
    %v337 = vld [vmem:[#allocation8 + $0x38] sm:$0xff]
    %v338 = vld [vmem:[#allocation8 + $0x40] sm:$0xff]
    %v339 = vld [vmem:[#allocation8 + $0x48] sm:$0xff]
    %v340 = vld [vmem:[#allocation8 + $0x50] sm:$0xff]
    %v341 = vld [vmem:[#allocation8 + $0x58] sm:$0xff]
    %v342 = vld [vmem:[#allocation8 + $0x60] sm:$0xff]
    %v343 = vld [vmem:[#allocation8 + $0x68] sm:$0xff]
    %v344 = vld [vmem:[#allocation8 + $0x70] sm:$0xff]
    %v345 = vld [vmem:[#allocation8 + $0x78] sm:$0xff]
    %v346 = vld [vmem:[#allocation8 + $0x80] sm:$0xff]
    %v347 = vld [vmem:[#allocation8 + $0x88] sm:$0xff]
    %v348 = vld [vmem:[#allocation8 + $0x90] sm:$0xff]
    %v349 = vld [vmem:[#allocation8 + $0x98] sm:$0xff]
    %v350 = vld [vmem:[#allocation8 + $0xa0] sm:$0xff]
    %v351 = vld [vmem:[#allocation8 + $0xa8] sm:$0xff]
    %v352 = vld [vmem:[#allocation8 + $0xb0] sm:$0xff]
    %v353 = vld [vmem:[#allocation8 + $0xb8] sm:$0xff]
    %v354 = vld [vmem:[#allocation8 + $0xc0] sm:$0xff]
    %v355 = vld [vmem:[#allocation8 + $0xc8] sm:$0xff]
    %v356 = vld [vmem:[#allocation8 + $0xd0] sm:$0xff]
    %v357 = vld [vmem:[#allocation8 + $0xd8] sm:$0xff]
    %v358 = vld [vmem:[#allocation8 + $0xe0] sm:$0xff]
    %v359 = vld [vmem:[#allocation8 + $0xe8] sm:$0xff]
    %v360 = vld [vmem:[#allocation8 + $0xf0] sm:$0xff]
    %v361 = vld [vmem:[#allocation8 + $0xf8] sm:$0xff]
    %v362 = vld [vmem:[%s6] sm:$0x3]
    %v364 = vlaneseq
    %v365 = vshrl.u32 %v364, 7
    %v366 = vsub.s32 0, %v365
    %v367 = vrot.slane %v362, %v366
    %v368 = vlaneseq
    %v369 = vshrl.u32 %v368, 7
    %v370 = vsub.s32 1, %v369
    %v371 = vrot.slane %v362, %v370
    %374 = vmatprep.subr.mxu0 %v331
    %375 = vmatpush1.msra.mxu0 %v330
    %376 = vmatprep.subr.mxu0 %v333
    %377 = vmatpush1.msra.mxu0 %v332
    %378 = vmatprep.subr.mxu0 %v335
    %379 = vmatpush1.msra.mxu0 %v334
    %380 = vmatprep.subr.mxu0 %v337
    %381 = vmatpush1.msra.mxu0 %v336
    %382 = vmatprep.subr.mxu0 %v339
    %383 = vmatpush1.msra.mxu0 %v338
    %384 = vmatprep.subr.mxu0 %v341
    %385 = vmatpush1.msra.mxu0 %v340
    %386 = vmatprep.subr.mxu0 %v343
    %387 = vmatpush1.msra.mxu0 %v342
    %388 = vmatprep.subr.mxu0 %v345
    %389 = vmatpush1.msra.mxu0 %v344
    %390 = vmatprep.subr.mxu0 %v347
    %391 = vmatpush1.msra.mxu0 %v346
    %392 = vmatprep.subr.mxu0 %v349
    %393 = vmatpush1.msra.mxu0 %v348
    %394 = vmatprep.subr.mxu0 %v351
    %395 = vmatpush1.msra.mxu0 %v350
    %396 = vmatprep.subr.mxu0 %v353
    %397 = vmatpush1.msra.mxu0 %v352
    %398 = vmatprep.subr.mxu0 %v355
    %399 = vmatpush1.msra.mxu0 %v354
    %400 = vmatprep.subr.mxu0 %v357
    %401 = vmatpush1.msra.mxu0 %v356
    %402 = vmatprep.subr.mxu0 %v359
    %403 = vmatpush1.msra.mxu0 %v358
    %404 = vmatprep.subr.mxu0 %v361
    %405 = vmatpush1.msra.mxu0 %v360
    %406 = vmatprep.subr.mxu0 0.0
    %407 = vmatpush1.msra.mxu0 0.0
    %408 = vmatprep.subr.mxu0 0.0
    %409 = vmatpush1.msra.mxu0 0.0
    %410 = vmatprep.subr.mxu0 0.0
    %411 = vmatpush1.msra.mxu0 0.0
    %412 = vmatprep.subr.mxu0 0.0
    %413 = vmatpush1.msra.mxu0 0.0
    %414 = vmatprep.subr.mxu0 0.0
    %415 = vmatpush1.msra.mxu0 0.0
    %416 = vmatprep.subr.mxu0 0.0
    %417 = vmatpush1.msra.mxu0 0.0
    %418 = vmatprep.subr.mxu0 0.0
    %419 = vmatpush1.msra.mxu0 0.0
    %420 = vmatprep.subr.mxu0 0.0
    %421 = vmatpush1.msra.mxu0 0.0
    %422 = vmatprep.subr.mxu0 0.0
    %423 = vmatpush1.msra.mxu0 0.0
    %424 = vmatprep.subr.mxu0 0.0
    %425 = vmatpush1.msra.mxu0 0.0
    %426 = vmatprep.subr.mxu0 0.0
    %427 = vmatpush1.msra.mxu0 0.0
    %428 = vmatprep.subr.mxu0 0.0
    %429 = vmatpush1.msra.mxu0 0.0
    %430 = vmatprep.subr.mxu0 0.0
    %431 = vmatpush1.msra.mxu0 0.0
    %432 = vmatprep.subr.mxu0 0.0
    %433 = vmatpush1.msra.mxu0 0.0
    %434 = vmatprep.subr.mxu0 0.0
    %435 = vmatpush1.msra.mxu0 0.0
    %436 = vmatprep.subr.mxu0 0.0
    %437 = vmatpush1.msra.mxu0 0.0
    %438 = vmatprep.mubr.f32.mxu0 0.0
    %439 = vmatmul.mubr.f32.gmra.mrb[0].mxu0 %v326
    %v440 = vpop.f32.mrb[0].mxu0
    %v441 = vadd.f32 %v367, %v440
    %v442 = vpop.f32.mrb[0].mxu0
    %v443 = vadd.f32 %v371, %v442
    %444 = vmatprep.mubr.f32.mxu0 0.0
    %445 = vmatmul.mubr.f32.gmra.mrb[0].mxu0 %v327
    %v446 = vpop.f32.mrb[0].mxu0
    %v447 = vadd.f32 %v367, %v446
    %v448 = vpop.f32.mrb[0].mxu0
    %v449 = vadd.f32 %v371, %v448
    %450 = vmatprep.mubr.f32.mxu0 0.0
    %451 = vmatmul.mubr.f32.gmra.mrb[0].mxu0 %v328
    %v452 = vpop.f32.mrb[0].mxu0
    %v453 = vadd.f32 %v367, %v452
    %v454 = vpop.f32.mrb[0].mxu0
    %v455 = vadd.f32 %v371, %v454
    %456 = vmatprep.mubr.f32.mxu0 0.0
    %457 = vmatmul.mubr.f32.gmra.mrb[0].mxu0 %v329
    %v458 = vpop.f32.mrb[0].mxu0
    %v459 = vadd.f32 %v367, %v458
    %v460 = vpop.f32.mrb[0].mxu0
    %v461 = vadd.f32 %v371, %v460
    %462 = vdwg.mxu0
    %463 = vst [vmem:[#allocation10] sm:$0xff] %v441
    %464 = vst [vmem:[#allocation10 + $0x8] sm:$0xff] %v443
    %465 = vst [vmem:[#allocation10 + $0x10] sm:$0xff] %v447
    %466 = vst [vmem:[#allocation10 + $0x18] sm:$0xff] %v449
    %467 = vst [vmem:[#allocation10 + $0x20] sm:$0xff] %v453
    %468 = vst [vmem:[#allocation10 + $0x28] sm:$0xff] %v455
    %469 = vst [vmem:[#allocation10 + $0x30] sm:$0xff] %v459
    %470 = vst [vmem:[#allocation10 + $0x38] sm:$0xff] %v461
    // Predicated region
    $region46: #{tpu_custom_call.1} parent=1 // pred_check
      _
    $region47: #{tpu_custom_call.1} parent=1 // pred_check_branch
      %472 = sbr.rel (0) target = $region49
    $region48: #{tpu_custom_call.1} parent=1 // pred_region
      %s474 = ssub.s32 1024, 1024
      %475 = vsyncadd [#allocation4], %s474
      %s476 = sshll.u32 [#allocation10], 4
      %s477 = int_to_ptr.vmem [resolvable:$true] %s476
      %482 = dma.vmem_to_hbm [thread:$0]  %s477, 1024, %s7, [#allocation4], 256, 256, 16
    $region49: #{tpu_custom_call.1} parent=1 // pred_fallthru
      _
    // Predicated region
    $region50: #{tpu_custom_call.1} parent=1 // pred_check
      _
    $region51: #{tpu_custom_call.1} parent=1 // pred_check_branch
      %484 = sbr.rel (0) target = $region53
    $region52: #{tpu_custom_call.1} parent=1 // pred_region
      %485 = dma.done [#allocation4], 1024
    $region53: #{tpu_custom_call.1} parent=1 // pred_fallthru
      _
    %486 = vsyncpa [#allocation3], 1
    %487 = vsyncpa [#allocation6], 1
    %488 = vsyncpa [#allocation9], 1
    %489 = vsyncpa [#allocation4], 1

</llo_original>
